<compile_context>
chip_gen: v7x
topology: tpu7x:2x2x1
jax: 0.10.0
libtpu: 0.0.40
codegen_flags: <defaults>
</compile_context>

<pallas_src>
import functools

import jax
import jax.numpy as jnp
from jax.experimental import pallas as pl
from jax.experimental.pallas import tpu as pltpu


L_PAD = 128            # lane-dense padded classifier width (both heads)
LOSS_TILE = (8, 128)   # minimal f32 tile used for the per-head loss output


def _round_up(x: int, m: int) -> int:
    return ((x + m - 1) // m) * m


def _pick_tk(hp: int) -> int:
    # Biggest K-tile that divides Hp: keeps grid steps few (per-step overhead
    # ~0.35us) while still double-buffering the dominant (tk, Hp) weight DMA.
    for tk in (512, 384, 256, 128):
        if hp % tk == 0:
            return tk
    return hp


# ----------------------------------------------------------------------------
# Pallas kernel: fused (pooler dense -> GELU -> classifier -> cross-entropy).
# grid = (head, K): head 0 = true head, head 1 = pseudo head; K tiles the hidden
# dim of the pooler matmul so weight DMA is pipelined against the MXU.
# ----------------------------------------------------------------------------
def _pslf_heads_kernel(
    x_ref,       # (B, tk)       bf16   CLS activations, K-slice
    wpool_ref,   # (1, tk, Hp)   bf16   pooler dense weight tile for head h
    bpool_ref,   # (1, 1, Hp)    f32    pooler dense bias for head h
    wcls_ref,    # (1, Hp, 128)  bf16   classifier weight (zero-padded columns)
    bcls_ref,    # (1, 1, 128)   f32    classifier bias  (zero-padded columns)
    lab_ref,     # (1, B, 1)     int32  labels for head h
    loss_ref,    # (1, 8, 128)   f32    out: per-head loss (broadcast tile)
    logits_ref,  # (1, B, 128)   f32    out: per-head padded logits
    acc_ref,     # (B, Hp)       f32    scratch: pooled-value accumulator
    *,
    num_labels,
    num_pseudo_labels,
):
    h = pl.program_id(0)    # 0 = true head, 1 = pseudo head
    k = pl.program_id(1)    # hidden-dim reduction step
    nk = pl.num_programs(1)

    @pl.when(k == 0)
    def _():
        acc_ref[...] = jnp.zeros_like(acc_ref)

    # Pooler dense partial product on the MXU: bf16 x bf16 -> f32 accumulate.
    acc_ref[...] += jnp.dot(
        x_ref[...], wpool_ref[0], preferred_element_type=jnp.float32
    )

    @pl.when(k == nk - 1)
    def _():
        pooled = acc_ref[...] + bpool_ref[0]                       # (B, Hp) f32
        # TODO(synk): DeBERTa's ContextPooler uses exact (erf) GELU; tanh-approx
        # GELU is used here since erf lowering on Mosaic is not guaranteed.
        pooled = jax.nn.gelu(pooled, approximate=True)             # keep f32

        # Classifier (padded to 128 lanes -> dense stores, dense MXU columns).
        logits = (
            jnp.dot(pooled.astype(jnp.bfloat16), wcls_ref[0],
                    preferred_element_type=jnp.float32)
            + bcls_ref[0]
        )                                                          # (B, 128) f32

        # Mean cross-entropy, matching F.cross_entropy(reduction='mean').
        # true_classifier runs on detach()'ed activations in PyTorch; forward
        # values are identical, so no special handling here.
        # TODO(synk): ignore_index=-100 semantics are not handled; labels assumed valid.
        n_valid = jnp.where(h == 0, num_labels, num_pseudo_labels)
        cols = jax.lax.broadcasted_iota(jnp.int32, logits.shape, 1)    # (B, 128)
        valid = cols < n_valid
        zm = jnp.where(valid, logits, jnp.float32(-1e30))          # mask padded lanes
        m = jnp.max(zm, axis=-1, keepdims=True)                    # (B, 1)
        z = zm - m
        lse = jnp.log(jnp.sum(jnp.exp(z), axis=-1, keepdims=True)) # (B, 1)
        picked = jnp.sum(jnp.where(cols == lab_ref[0], z, 0.0),
                         axis=-1, keepdims=True)                   # (B, 1)
        nll = lse - picked
        loss_h = jnp.mean(nll, axis=0, keepdims=True)              # (1, 1)

        loss_ref[0] = jnp.broadcast_to(loss_h, LOSS_TILE)
        logits_ref[0] = logits


def pack_pslf_head_params(params):
    """One-time packing of both heads' weights for the fused kernel.

    Pads the hidden dim to a lane-aligned size, pads classifier columns to 128,
    stacks [true, pseudo] along a leading head axis and casts matmul operands to
    bf16.  Call this ONCE (outside jit) so the dominant (H, H) weights are not
    re-padded / re-cast / re-stacked on every forward pass.
    """
    H = params["wp_t"].shape[0]
    Lt = params["wc_t"].shape[1]
    Lp = params["wc_p"].shape[1]
    assert Lt <= L_PAD and Lp <= L_PAD, "classifier widths > 128 need N-tiling"
    Hp = _round_up(H, 128)

    def pad2(w, rows, cols):
        return jnp.pad(w, ((0, rows - w.shape[0]), (0, cols - w.shape[1])))

    return {
        "H": H, "Hp": Hp, "Lt": Lt, "Lp": Lp,
        # bf16 matmul operands (halves HBM bytes on the dominant (H,H) weights,
        # 2x MXU rate on v6e/v7x); biases + elementwise math stay f32.
        "wpool": jnp.stack([pad2(params["wp_t"], Hp, Hp),
                            pad2(params["wp_p"], Hp, Hp)]).astype(jnp.bfloat16),   # (2,Hp,Hp)
        "bpool": jnp.stack([pad2(params["bp_t"], 1, Hp),
                            pad2(params["bp_p"], 1, Hp)]).astype(jnp.float32),     # (2,1,Hp)
        "wcls":  jnp.stack([pad2(params["wc_t"], Hp, L_PAD),
                            pad2(params["wc_p"], Hp, L_PAD)]).astype(jnp.bfloat16),  # (2,Hp,128)
        "bcls":  jnp.stack([pad2(params["bc_t"], 1, L_PAD),
                            pad2(params["bc_p"], 1, L_PAD)]).astype(jnp.float32),    # (2,1,128)
    }


def pslf_heads(act_cls, packed, labels, pseudo_labels):
    """Fused heads + loss. act_cls: (B, H) f32; labels/pseudo_labels: (B,) ints.

    Returns (loss scalar f32, true_logits (B, Lt) f32, pseudo_logits (B, Lp) f32).
    """
    B, H = act_cls.shape
    Hp, Lt, Lp = packed["Hp"], packed["Lt"], packed["Lp"]
    assert H == packed["H"]

    tk = _pick_tk(Hp)
    grid_k = Hp // tk

    # Per-call activation prep is tiny (B x H) and fuses inside the jit.
    x = jnp.pad(act_cls, ((0, 0), (0, Hp - H))).astype(jnp.bfloat16)           # (B, Hp)
    labs = jnp.stack([labels.reshape(B, 1),
                      pseudo_labels.reshape(B, 1)]).astype(jnp.int32)          # (2, B, 1)

    kernel = functools.partial(
        _pslf_heads_kernel, num_labels=Lt, num_pseudo_labels=Lp
    )

    loss_tiles, logits_pad = pl.pallas_call(
        kernel,
        out_shape=(
            jax.ShapeDtypeStruct((2,) + LOSS_TILE, jnp.float32),    # per-head loss
            jax.ShapeDtypeStruct((2, B, L_PAD), jnp.float32),       # padded logits
        ),
        grid=(2, grid_k),
        in_specs=[
            pl.BlockSpec((B, tk), lambda h, k: (0, k)),             # activations
            pl.BlockSpec((1, tk, Hp), lambda h, k: (h, k, 0)),      # pooler weight
            pl.BlockSpec((1, 1, Hp), lambda h, k: (h, 0, 0)),       # pooler bias
            pl.BlockSpec((1, Hp, L_PAD), lambda h, k: (h, 0, 0)),   # classifier weight
            pl.BlockSpec((1, 1, L_PAD), lambda h, k: (h, 0, 0)),    # classifier bias
            pl.BlockSpec((1, B, 1), lambda h, k: (h, 0, 0)),        # labels
        ],
        out_specs=(
            pl.BlockSpec((1,) + LOSS_TILE, lambda h, k: (h, 0, 0)),
            pl.BlockSpec((1, B, L_PAD), lambda h, k: (h, 0, 0)),
        ),
        scratch_shapes=[pltpu.VMEM((B, Hp), jnp.float32)],
        compiler_params=pltpu.CompilerParams(
            dimension_semantics=("parallel", "arbitrary"),
            vmem_limit_bytes=32 * 1024 * 1024,
        ),
    )(x, packed["wpool"], packed["bpool"], packed["wcls"], packed["bcls"], labs)

    loss = loss_tiles[0, 0, 0] + loss_tiles[1, 0, 0]
    true_logits = logits_pad[0, :, :Lt]
    pseudo_logits = logits_pad[1, :, :Lp]
    return loss, true_logits, pseudo_logits


# ----------------------------------------------------------------------------
# Glue: synthetic deterministic "backbone" + parameter init (plain JAX).
# ----------------------------------------------------------------------------
def init_params(key, vocab, H, num_labels, num_pseudo_labels):
    ks = jax.random.split(key, 12)
    s = 0.02
    return {
        # stub backbone (stands in for deberta + LoRA)
        "emb":   jax.random.normal(ks[0], (vocab, H), jnp.float32) * s,
        "w_enc": jax.random.normal(ks[1], (H, H), jnp.float32) * s,
        "b_enc": jnp.zeros((H,), jnp.float32),
        # true head: pooler dense + classifier
        "wp_t": jax.random.normal(ks[2], (H, H), jnp.float32) * s,
        "bp_t": jax.random.normal(ks[3], (1, H), jnp.float32) * s,
        "wc_t": jax.random.normal(ks[4], (H, num_labels), jnp.float32) * s,
        "bc_t": jax.random.normal(ks[5], (1, num_labels), jnp.float32) * s,
        # pseudo head: (deepcopied) pooler dense + fresh linear
        "wp_p": jax.random.normal(ks[6], (H, H), jnp.float32) * s,
        "bp_p": jax.random.normal(ks[7], (1, H), jnp.float32) * s,
        "wc_p": jax.random.normal(ks[8], (H, num_pseudo_labels), jnp.float32) * s,
        "bc_p": jax.random.normal(ks[9], (1, num_pseudo_labels), jnp.float32) * s,
    }


def model_pslf_forward(params, packed, input_ids, attention_mask, labels, pseudo_labels):
    """Mirrors ModelPSLF.forward (deberta path, training mode).

    Returns (loss, true_logits, [activations], shifts=None, activations).
    """
    # TODO(synk): the HF DeBERTa transformer backbone (+ LoRA adapters) has no
    # clean single-kernel Pallas equivalent; replaced by a tiny deterministic
    # embedding + linear + tanh encoder producing last_hidden_state (B, S, H).
    emb = params["emb"][input_ids]                                   # (B, S, H)
    activations = jnp.tanh(emb @ params["w_enc"] + params["b_enc"])  # (B, S, H)
    activations = activations * attention_mask[..., None].astype(activations.dtype)

    # Both DeBERTa ContextPoolers consume only the CLS token; the (B, H) slice
    # fuses with the zero-padding / bf16 cast inside the jit (pure layout plumbing).
    act_cls = activations[:, 0, :]

    loss, true_logits, _pseudo_logits = pslf_heads(
        act_cls, packed, labels, pseudo_labels
    )

    shifts = None  # training mode: eval-only baseline/shift branch is skipped
    return loss, true_logits, [activations], shifts, activations


if __name__ == "__main__":
    B, S, H, V = 8, 8, 32, 50
    NUM_LABELS, NUM_PSEUDO = 2, 2

    key = jax.random.PRNGKey(0)
    k_param, k_ids, k_lab, k_plab = jax.random.split(key, 4)

    params = init_params(k_param, V, H, NUM_LABELS, NUM_PSEUDO)
    packed = pack_pslf_head_params(params)     # one-time weight packing (outside jit)
    input_ids = jax.random.randint(k_ids, (B, S), 0, V, dtype=jnp.int32)
    attention_mask = jnp.ones((B, S), jnp.float32)
    labels = jax.random.randint(k_lab, (B,), 0, NUM_LABELS, dtype=jnp.int32)
    pseudo_labels = jax.random.randint(k_plab, (B,), 0, NUM_PSEUDO, dtype=jnp.int32)

    fwd = jax.jit(functools.partial(model_pslf_forward, params, packed))
    loss, true_logits, acts_list, shifts, acts = fwd(
        input_ids, attention_mask, labels, pseudo_labels
    )
    jax.block_until_ready((loss, true_logits, acts_list[0], acts))

    assert loss.shape == ()
    assert bool(jnp.isfinite(loss))
    assert true_logits.shape == (B, NUM_LABELS)
    assert acts.shape == (B, S, H)
    assert shifts is None
    print("KERNEL_OK")
</pallas_src>

<mosaic_0001>
module attributes {stable_mosaic.version = 11 : i64} {
  func.func @_pslf_heads_kernel(%arg0: i32, %arg1: i32, %arg2: memref<8x128xbf16, #tpu.memory_space<vmem>>, %arg3: memref<1x128x128xbf16, #tpu.memory_space<vmem>>, %arg4: memref<1x1x128xf32, #tpu.memory_space<vmem>>, %arg5: memref<1x128x128xbf16, #tpu.memory_space<vmem>>, %arg6: memref<1x1x128xf32, #tpu.memory_space<vmem>>, %arg7: memref<1x8x1xi32, #tpu.memory_space<vmem>>, %arg8: memref<1x8x128xf32, #tpu.memory_space<vmem>>, %arg9: memref<1x8x128xf32, #tpu.memory_space<vmem>>, %arg10: memref<8x128xf32, #tpu.memory_space<vmem>>) attributes {dimension_semantics = [#tpu.dimension_semantics<parallel>, #tpu.dimension_semantics<arbitrary>], iteration_bounds = array<i64: 2, 1>, scalar_prefetch = 0 : i64, scratch_operands = 1 : i64, tpu.core_type = #tpu.core_type<tc>, window_params = [{transform_indices = @transform_0, window_bounds = array<i64: 8, 128>}, {transform_indices = @transform_1, window_bounds = array<i64: 1, 128, 128>}, {transform_indices = @transform_2, window_bounds = array<i64: 1, 1, 128>}, {transform_indices = @transform_3, window_bounds = array<i64: 1, 128, 128>}, {transform_indices = @transform_4, window_bounds = array<i64: 1, 1, 128>}, {transform_indices = @transform_5, window_bounds = array<i64: 1, 8, 1>}, {transform_indices = @transform_6, window_bounds = array<i64: 1, 8, 128>}, {transform_indices = @transform_7, window_bounds = array<i64: 1, 8, 128>}]} {
    %c0_i32 = arith.constant 0 : i32
    %0 = arith.cmpi eq, %arg1, %c0_i32 : i32
    %1 = arith.extui %0 : i1 to i32
    %c0_i32_0 = arith.constant 0 : i32
    %2 = arith.cmpi ne, %1, %c0_i32_0 : i32
    scf.if %2 {
      %cst_11 = arith.constant 0.000000e+00 : f32
      %13 = vector.broadcast %cst_11 : f32 to vector<8x128xf32>
      %c0_12 = arith.constant 0 : index
      %c0_13 = arith.constant 0 : index
      %14 = vector.load %arg10[%c0_12, %c0_13] : memref<8x128xf32, #tpu.memory_space<vmem>>, vector<8x128xf32>
      tpu.vector_store %arg10[%c0_12, %c0_13], %13 {strides = array<i32>} : memref<8x128xf32, #tpu.memory_space<vmem>>, vector<8x128xf32>,
    } else {
    }
    %c0 = arith.constant 0 : index
    %c0_1 = arith.constant 0 : index
    %3 = vector.load %arg10[%c0, %c0_1] : memref<8x128xf32, #tpu.memory_space<vmem>>, vector<8x128xf32>
    %c0_2 = arith.constant 0 : index
    %c0_3 = arith.constant 0 : index
    %4 = vector.load %arg2[%c0_2, %c0_3] : memref<8x128xbf16, #tpu.memory_space<vmem>>, vector<8x128xbf16>
    %c0_4 = arith.constant 0 : index
    %c0_5 = arith.constant 0 : index
    %c0_6 = arith.constant 0 : index
    %5 = vector.load %arg3[%c0_4, %c0_5, %c0_6] : memref<1x128x128xbf16, #tpu.memory_space<vmem>>, vector<1x128x128xbf16>
    %6 = vector.shape_cast %5 : vector<1x128x128xbf16> to vector<128x128xbf16>
    %cst = arith.constant dense<0.000000e+00> : vector<8x128xf32>
    %7 = tpu.matmul %4, %6, %cst {dimension_numbers = #tpu.dot_dimension_numbers<[1], [0], [0], [1], [0, 0, 1, 1], [], []>} : vector<8x128xbf16>, vector<128x128xbf16>, vector<8x128xf32> -> vector<8x128xf32>
    %8 = arith.addf %3, %7 : vector<8x128xf32>
    %c0_7 = arith.constant 0 : index
    %c0_8 = arith.constant 0 : index
    %9 = vector.load %arg10[%c0_7, %c0_8] : memref<8x128xf32, #tpu.memory_space<vmem>>, vector<8x128xf32>
    tpu.vector_store %arg10[%c0_7, %c0_8], %8 {strides = array<i32>} : memref<8x128xf32, #tpu.memory_space<vmem>>, vector<8x128xf32>,
    %c0_i32_9 = arith.constant 0 : i32
    %10 = arith.cmpi eq, %arg1, %c0_i32_9 : i32
    %11 = arith.extui %10 : i1 to i32
    %c0_i32_10 = arith.constant 0 : i32
    %12 = arith.cmpi ne, %11, %c0_i32_10 : i32
    scf.if %12 {
      %c0_11 = arith.constant 0 : index
      %c0_12 = arith.constant 0 : index
      %13 = vector.load %arg10[%c0_11, %c0_12] : memref<8x128xf32, #tpu.memory_space<vmem>>, vector<8x128xf32>
      %c0_13 = arith.constant 0 : index
      %c0_14 = arith.constant 0 : index
      %c0_15 = arith.constant 0 : index
      %14 = vector.load %arg4[%c0_13, %c0_14, %c0_15] : memref<1x1x128xf32, #tpu.memory_space<vmem>>, vector<1x1x128xf32>
      %15 = vector.shape_cast %14 : vector<1x1x128xf32> to vector<1x128xf32>
      %16 = vector.broadcast %15 : vector<1x128xf32> to vector<8x128xf32>
      %17 = arith.addf %13, %16 : vector<8x128xf32>
      %18 = arith.mulf %17, %17 : vector<8x128xf32>
      %19 = arith.mulf %17, %18 : vector<8x128xf32>
      %cst_16 = arith.constant 4.471500e-02 : f32
      %20 = vector.broadcast %cst_16 : f32 to vector<8x128xf32>
      %21 = arith.mulf %20, %19 : vector<8x128xf32>
      %22 = arith.addf %17, %21 : vector<8x128xf32>
      %cst_17 = arith.constant 0.797884583 : f32
      %23 = vector.broadcast %cst_17 : f32 to vector<8x128xf32>
      %24 = arith.mulf %23, %22 : vector<8x128xf32>
      %25 = math.tanh %24 : vector<8x128xf32>
      %cst_18 = arith.constant 1.000000e+00 : f32
      %26 = vector.broadcast %cst_18 : f32 to vector<8x128xf32>
      %27 = arith.addf %26, %25 : vector<8x128xf32>
      %cst_19 = arith.constant 5.000000e-01 : f32
      %28 = vector.broadcast %cst_19 : f32 to vector<8x128xf32>
      %29 = arith.mulf %28, %27 : vector<8x128xf32>
      %30 = arith.mulf %17, %29 : vector<8x128xf32>
      %31 = arith.truncf %30 : vector<8x128xf32> to vector<8x128xbf16>
      %c0_20 = arith.constant 0 : index
      %c0_21 = arith.constant 0 : index
      %c0_22 = arith.constant 0 : index
      %32 = vector.load %arg5[%c0_20, %c0_21, %c0_22] : memref<1x128x128xbf16, #tpu.memory_space<vmem>>, vector<1x128x128xbf16>
      %33 = vector.shape_cast %32 : vector<1x128x128xbf16> to vector<128x128xbf16>
      %cst_23 = arith.constant dense<0.000000e+00> : vector<8x128xf32>
      %34 = tpu.matmul %31, %33, %cst_23 {dimension_numbers = #tpu.dot_dimension_numbers<[1], [0], [0], [1], [0, 0, 1, 1], [], []>} : vector<8x128xbf16>, vector<128x128xbf16>, vector<8x128xf32> -> vector<8x128xf32>
      %c0_24 = arith.constant 0 : index
      %c0_25 = arith.constant 0 : index
      %c0_26 = arith.constant 0 : index
      %35 = vector.load %arg6[%c0_24, %c0_25, %c0_26] : memref<1x1x128xf32, #tpu.memory_space<vmem>>, vector<1x1x128xf32>
      %36 = vector.shape_cast %35 : vector<1x1x128xf32> to vector<1x128xf32>
      %37 = vector.broadcast %36 : vector<1x128xf32> to vector<8x128xf32>
      %38 = arith.addf %34, %37 : vector<8x128xf32>
      %c0_i32_27 = arith.constant 0 : i32
      %39 = arith.cmpi eq, %arg0, %c0_i32_27 : i32
      %c2_i32 = arith.constant 2 : i32
      %c2_i32_28 = arith.constant 2 : i32
      %40 = arith.select %39, %c2_i32, %c2_i32_28 : i32
      %41 = tpu.iota {dimensions = array<i32: 1>} : vector<8x128xi32>
      %42 = vector.broadcast %40 : i32 to vector<8x128xi32>
      %43 = arith.cmpi slt, %41, %42 : vector<8x128xi32>
      %cst_29 = arith.constant -1.000000e+30 : f32
      %44 = vector.broadcast %cst_29 : f32 to vector<8x128xf32>
      %45 = arith.select %43, %38, %44 : vector<8x128xi1>, vector<8x128xf32>
      %cst_30 = arith.constant dense<0xFF800000> : vector<8xf32>
      %46 = vector.multi_reduction <maximumf>, %45, %cst_30 [1] : vector<8x128xf32> to vector<8xf32>
      %47 = vector.shape_cast %46 : vector<8xf32> to vector<8x1xf32>
      %48 = vector.broadcast %47 : vector<8x1xf32> to vector<8x128xf32>
      %49 = arith.subf %45, %48 : vector<8x128xf32>
      %50 = math.exp %49 : vector<8x128xf32>
      %cst_31 = arith.constant dense<0.000000e+00> : vector<8xf32>
      %51 = vector.multi_reduction <add>, %50, %cst_31 [1] : vector<8x128xf32> to vector<8xf32>
      %52 = vector.shape_cast %51 : vector<8xf32> to vector<8x1xf32>
      %53 = math.log %52 : vector<8x1xf32>
      %c0_32 = arith.constant 0 : index
      %c0_33 = arith.constant 0 : index
      %c0_34 = arith.constant 0 : index
      %54 = vector.load %arg7[%c0_32, %c0_33, %c0_34] : memref<1x8x1xi32, #tpu.memory_space<vmem>>, vector<1x8x1xi32>
      %55 = vector.shape_cast %54 : vector<1x8x1xi32> to vector<8x1xi32>
      %56 = vector.broadcast %55 : vector<8x1xi32> to vector<8x128xi32>
      %57 = arith.cmpi eq, %41, %56 : vector<8x128xi32>
      %cst_35 = arith.constant 0.000000e+00 : f32
      %58 = vector.broadcast %cst_35 : f32 to vector<8x128xf32>
      %59 = arith.select %57, %49, %58 : vector<8x128xi1>, vector<8x128xf32>
      %cst_36 = arith.constant dense<0.000000e+00> : vector<8xf32>
      %60 = vector.multi_reduction <add>, %59, %cst_36 [1] : vector<8x128xf32> to vector<8xf32>
      %61 = vector.shape_cast %60 : vector<8xf32> to vector<8x1xf32>
      %62 = arith.subf %53, %61 : vector<8x1xf32>
      %cst_37 = arith.constant dense<0.000000e+00> : vector<1xf32>
      %63 = vector.multi_reduction <add>, %62, %cst_37 [0] : vector<8x1xf32> to vector<1xf32>
      %64 = vector.shape_cast %63 : vector<1xf32> to vector<1x1xf32>
      %cst_38 = arith.constant 8.000000e+00 : f32
      %65 = vector.broadcast %cst_38 : f32 to vector<1x1xf32>
      %66 = arith.divf %64, %65 : vector<1x1xf32>
      %67 = vector.shape_cast %66 : vector<1x1xf32> to vector<1x1xf32>
      %68 = vector.broadcast %67 : vector<1x1xf32> to vector<8x128xf32>
      %c0_39 = arith.constant 0 : index
      %c0_40 = arith.constant 0 : index
      %c0_41 = arith.constant 0 : index
      %69 = vector.load %arg8[%c0_39, %c0_40, %c0_41] : memref<1x8x128xf32, #tpu.memory_space<vmem>>, vector<1x8x128xf32>
      %70 = vector.shape_cast %69 : vector<1x8x128xf32> to vector<8x128xf32>
      %71 = vector.shape_cast %68 : vector<8x128xf32> to vector<1x8x128xf32>
      tpu.vector_store %arg8[%c0_39, %c0_40, %c0_41], %71 {strides = array<i32>} : memref<1x8x128xf32, #tpu.memory_space<vmem>>, vector<1x8x128xf32>,
      %c0_42 = arith.constant 0 : index
      %c0_43 = arith.constant 0 : index
      %c0_44 = arith.constant 0 : index
      %72 = vector.load %arg9[%c0_42, %c0_43, %c0_44] : memref<1x8x128xf32, #tpu.memory_space<vmem>>, vector<1x8x128xf32>
      %73 = vector.shape_cast %72 : vector<1x8x128xf32> to vector<8x128xf32>
      %74 = vector.shape_cast %38 : vector<8x128xf32> to vector<1x8x128xf32>
      tpu.vector_store %arg9[%c0_42, %c0_43, %c0_44], %74 {strides = array<i32>} : memref<1x8x128xf32, #tpu.memory_space<vmem>>, vector<1x8x128xf32>,
    } else {
    }
    return
  }
  func.func @transform_0(%arg0: i32, %arg1: i32) -> (i32, i32) {
    %c0_i32 = arith.constant 0 : i32
    %c0_i32_0 = arith.constant 0 : i32
    return %c0_i32, %arg1 : i32, i32
  }
  func.func @transform_1(%arg0: i32, %arg1: i32) -> (i32, i32, i32) {
    %c0_i32 = arith.constant 0 : i32
    %c0_i32_0 = arith.constant 0 : i32
    return %arg0, %arg1, %c0_i32 : i32, i32, i32
  }
  func.func @transform_2(%arg0: i32, %arg1: i32) -> (i32, i32, i32) {
    %c0_i32 = arith.constant 0 : i32
    %c0_i32_0 = arith.constant 0 : i32
    %c0_i32_1 = arith.constant 0 : i32
    return %arg0, %c0_i32, %c0_i32_0 : i32, i32, i32
  }
  func.func @transform_3(%arg0: i32, %arg1: i32) -> (i32, i32, i32) {
    %c0_i32 = arith.constant 0 : i32
    %c0_i32_0 = arith.constant 0 : i32
    %c0_i32_1 = arith.constant 0 : i32
    return %arg0, %c0_i32, %c0_i32_0 : i32, i32, i32
  }
  func.func @transform_4(%arg0: i32, %arg1: i32) -> (i32, i32, i32) {
    %c0_i32 = arith.constant 0 : i32
    %c0_i32_0 = arith.constant 0 : i32
    %c0_i32_1 = arith.constant 0 : i32
    return %arg0, %c0_i32, %c0_i32_0 : i32, i32, i32
  }
  func.func @transform_5(%arg0: i32, %arg1: i32) -> (i32, i32, i32) {
    %c0_i32 = arith.constant 0 : i32
    %c0_i32_0 = arith.constant 0 : i32
    %c0_i32_1 = arith.constant 0 : i32
    return %arg0, %c0_i32, %c0_i32_0 : i32, i32, i32
  }
  func.func @transform_6(%arg0: i32, %arg1: i32) -> (i32, i32, i32) {
    %c0_i32 = arith.constant 0 : i32
    %c0_i32_0 = arith.constant 0 : i32
    %c0_i32_1 = arith.constant 0 : i32
    return %arg0, %c0_i32, %c0_i32_0 : i32, i32, i32
  }
  func.func @transform_7(%arg0: i32, %arg1: i32) -> (i32, i32, i32) {
    %c0_i32 = arith.constant 0 : i32
    %c0_i32_0 = arith.constant 0 : i32
    %c0_i32_1 = arith.constant 0 : i32
    return %arg0, %c0_i32, %c0_i32_0 : i32, i32, i32
  }
}

</mosaic_0001>

<llo_original>
// kernel: model_pslf_forward.1
$region0: #{model_pslf_forward.1}
  #allocation0 [shape = 'u32[]', space=smem, size = 0x4, offset = 0x4, fixed_abs, tag = 'smem constant byte address 0x4 - core index']
  #allocation1 [shape = 'u32[144,128]{1,0:T(1,128)}', space=vmem, size = 0x12000, scoped, tag = 'internal scratch']
  #allocation2 [shape = 'f32[8,128]{1,0:T(8,128)}', space=vmem, size = 0x1000, scoped, tag = 'scratch operand']
  %s0 = inlined_call_operand.vmem [shape: bf16[8,128], index: 0, kind: input, shape index: {}]
  %s1 = inlined_call_operand.vmem [shape: bf16[2,128,128], index: 1, kind: input, shape index: {}]
  %s2 = inlined_call_operand.vmem [shape: f32[2,1,128], index: 2, kind: input, shape index: {}]
  %s3 = inlined_call_operand.vmem [shape: bf16[2,128,128], index: 3, kind: input, shape index: {}]
  %s4 = inlined_call_operand.vmem [shape: f32[2,1,128], index: 4, kind: input, shape index: {}]
  %s5 = inlined_call_operand.vmem [shape: s32[2,8,1], index: 5, kind: input, shape index: {}]
  %s6 = inlined_call_operand.vmem [shape: f32[2,8,128], index: 6, kind: output, shape index: {0}]
  %s7 = inlined_call_operand.vmem [shape: f32[2,8,128], index: 7, kind: output, shape index: {1}]
  %8 = xla_tuple %s6, %s7
  %s9 = sld [smem:[#allocation0]]
  $region73: #{model_pslf_forward.1} parent=0
    _
  %s11 = ssub.s32 1, %s9
  %s12 = scalar_select 0, %s11, %s9
  loop: start=0, step=1, limit=4
  $region2: #{model_pslf_forward.1} parent=0 // loop_pre_header
    _
  $region3: #{model_pslf_forward.1} parent=0 // loop_header
    %s14 = sphi 0, %s18
    %p15 = scmp.ge.s32.totalorder %s14, 4
    %s21 = sphi 0, %s33
    %s22 = sphi 0, %s29
    %s23 = sphi 0, %s21
    %s24 = sphi 0, %s22
    %s25 = sphi 0, %s23
    %s26 = sphi 0, %s24
    %s36 = sphi 0, %s38
    %s39 = sphi 0, %s36
    %s40 = sphi 0, %s39
    %s56 = sphi 0, %s40
    %s64 = sphi 0, %s66
    %s67 = sphi 0, %s64
    %s68 = sphi 0, %s67
    %s84 = sphi 0, %s68
    %s90 = sphi 0, %s92
    %s93 = sphi 0, %s90
    %s94 = sphi 0, %s93
    %s110 = sphi 0, %s94
    %s116 = sphi 0, %s118
    %s119 = sphi 0, %s116
    %s120 = sphi 0, %s119
    %s136 = sphi 0, %s120
    %s142 = sphi 0, %s144
    %s145 = sphi 0, %s142
    %s146 = sphi 0, %s145
    %s162 = sphi 0, %s146
    %s168 = sphi 0, %s170
    %s171 = sphi 0, %s168
    %s172 = sphi 0, %s171
    %s188 = sphi 0, %s172
    %s194 = sphi 0, %s196
    %s197 = sphi 0, %s194
    %s198 = sphi 0, %s197
    %s214 = sphi 0, %s198
    %s220 = sphi 0, %s222
    %s223 = sphi 0, %s220
    %s224 = sphi 0, %s223
    %s240 = sphi 0, %s224
  $region4: #{model_pslf_forward.1} parent=0 // loop_header_branch
    %17 = sbr.rel (%p15) target = $region8
  $region5: #{model_pslf_forward.1} parent=0 // loop_body
    %s19 = ssub.s32 %s14, 1
    %s20 = ssub.s32 %s14, 2
    %s27 = sadd.s32 1, %s22
    %p28 = scmp.ge.s32.totalorder %s27, 1
    %s29 = scalar_select %p28, 0, %s27
    %s30 = sadd.s32 1, %s21
    %s31 = scalar_select %p28, %s30, %s21
    %p32 = scmp.ge.s32.totalorder %s31, 2
    %s33 = scalar_select %p32, 0, %s31
    %s34 = ssub.s32 %s22, %s29
    %p35 = scmp.eq.s32.totalorder %s34, 0
    %s37 = sadd.s32 %s36, 1
    %s38 = scalar_select %p35, %s36, %s37
    %p41 = pneg %p35
    %p42 = scmp.eq.s32.totalorder %s14, 1
    %p43 = por %p41, %p42
    %p44 = scmp.ne.s32.totalorder %s36, %s39
    %p45 = scmp.eq.s32.totalorder %s14, 0
    %p46 = por %p44, %p45
    %p47 = scmp.ne.s32.totalorder %s36, %s39
    %p48 = scmp.eq.s32.totalorder %s19, 1
    %p49 = por %p47, %p48
    %p50 = scmp.ne.s32.totalorder %s39, %s40
    %p51 = scmp.eq.s32.totalorder %s19, 0
    %p52 = por %p50, %p51
    %p53 = scmp.ne.s32.totalorder %s39, %s40
    %p54 = scmp.eq.s32.totalorder %s20, 1
    %p55 = por %p53, %p54
    %p57 = scmp.ne.s32.totalorder %s40, %s56
    %p58 = scmp.eq.s32.totalorder %s20, 0
    %p59 = por %p57, %p58
    %s60 = ssub.s32 %s21, %s33
    %s61 = ssub.s32 %s22, %s29
    %s62 = sor.u32 %s60, %s61
    %p63 = scmp.eq.s32.totalorder %s62, 0
    %s65 = sadd.s32 %s64, 1
    %s66 = scalar_select %p63, %s64, %s65
    %p69 = pneg %p63
    %p70 = scmp.eq.s32.totalorder %s14, 1
    %p71 = por %p69, %p70
    %p72 = scmp.ne.s32.totalorder %s64, %s67
    %p73 = scmp.eq.s32.totalorder %s14, 0
    %p74 = por %p72, %p73
    %p75 = scmp.ne.s32.totalorder %s64, %s67
    %p76 = scmp.eq.s32.totalorder %s19, 1
    %p77 = por %p75, %p76
    %p78 = scmp.ne.s32.totalorder %s67, %s68
    %p79 = scmp.eq.s32.totalorder %s19, 0
    %p80 = por %p78, %p79
    %p81 = scmp.ne.s32.totalorder %s67, %s68
    %p82 = scmp.eq.s32.totalorder %s20, 1
    %p83 = por %p81, %p82
    %p85 = scmp.ne.s32.totalorder %s68, %s84
    %p86 = scmp.eq.s32.totalorder %s20, 0
    %p87 = por %p85, %p86
    %s88 = ssub.s32 %s21, %s33
    %p89 = scmp.eq.s32.totalorder %s88, 0
    %s91 = sadd.s32 %s90, 1
    %s92 = scalar_select %p89, %s90, %s91
    %p95 = pneg %p89
    %p96 = scmp.eq.s32.totalorder %s14, 1
    %p97 = por %p95, %p96
    %p98 = scmp.ne.s32.totalorder %s90, %s93
    %p99 = scmp.eq.s32.totalorder %s14, 0
    %p100 = por %p98, %p99
    %p101 = scmp.ne.s32.totalorder %s90, %s93
    %p102 = scmp.eq.s32.totalorder %s19, 1
    %p103 = por %p101, %p102
    %p104 = scmp.ne.s32.totalorder %s93, %s94
    %p105 = scmp.eq.s32.totalorder %s19, 0
    %p106 = por %p104, %p105
    %p107 = scmp.ne.s32.totalorder %s93, %s94
    %p108 = scmp.eq.s32.totalorder %s20, 1
    %p109 = por %p107, %p108
    %p111 = scmp.ne.s32.totalorder %s94, %s110
    %p112 = scmp.eq.s32.totalorder %s20, 0
    %p113 = por %p111, %p112
    %s114 = ssub.s32 %s21, %s33
    %p115 = scmp.eq.s32.totalorder %s114, 0
    %s117 = sadd.s32 %s116, 1
    %s118 = scalar_select %p115, %s116, %s117
    %p121 = pneg %p115
    %p122 = scmp.eq.s32.totalorder %s14, 1
    %p123 = por %p121, %p122
    %p124 = scmp.ne.s32.totalorder %s116, %s119
    %p125 = scmp.eq.s32.totalorder %s14, 0
    %p126 = por %p124, %p125
    %p127 = scmp.ne.s32.totalorder %s116, %s119
    %p128 = scmp.eq.s32.totalorder %s19, 1
    %p129 = por %p127, %p128
    %p130 = scmp.ne.s32.totalorder %s119, %s120
    %p131 = scmp.eq.s32.totalorder %s19, 0
    %p132 = por %p130, %p131
    %p133 = scmp.ne.s32.totalorder %s119, %s120
    %p134 = scmp.eq.s32.totalorder %s20, 1
    %p135 = por %p133, %p134
    %p137 = scmp.ne.s32.totalorder %s120, %s136
    %p138 = scmp.eq.s32.totalorder %s20, 0
    %p139 = por %p137, %p138
    %s140 = ssub.s32 %s21, %s33
    %p141 = scmp.eq.s32.totalorder %s140, 0
    %s143 = sadd.s32 %s142, 1
    %s144 = scalar_select %p141, %s142, %s143
    %p147 = pneg %p141
    %p148 = scmp.eq.s32.totalorder %s14, 1
    %p149 = por %p147, %p148
    %p150 = scmp.ne.s32.totalorder %s142, %s145
    %p151 = scmp.eq.s32.totalorder %s14, 0
    %p152 = por %p150, %p151
    %p153 = scmp.ne.s32.totalorder %s142, %s145
    %p154 = scmp.eq.s32.totalorder %s19, 1
    %p155 = por %p153, %p154
    %p156 = scmp.ne.s32.totalorder %s145, %s146
    %p157 = scmp.eq.s32.totalorder %s19, 0
    %p158 = por %p156, %p157
    %p159 = scmp.ne.s32.totalorder %s145, %s146
    %p160 = scmp.eq.s32.totalorder %s20, 1
    %p161 = por %p159, %p160
    %p163 = scmp.ne.s32.totalorder %s146, %s162
    %p164 = scmp.eq.s32.totalorder %s20, 0
    %p165 = por %p163, %p164
    %s166 = ssub.s32 %s21, %s33
    %p167 = scmp.eq.s32.totalorder %s166, 0
    %s169 = sadd.s32 %s168, 1
    %s170 = scalar_select %p167, %s168, %s169
    %p173 = pneg %p167
    %p174 = scmp.eq.s32.totalorder %s14, 1
    %p175 = por %p173, %p174
    %p176 = scmp.ne.s32.totalorder %s168, %s171
    %p177 = scmp.eq.s32.totalorder %s14, 0
    %p178 = por %p176, %p177
    %p179 = scmp.ne.s32.totalorder %s168, %s171
    %p180 = scmp.eq.s32.totalorder %s19, 1
    %p181 = por %p179, %p180
    %p182 = scmp.ne.s32.totalorder %s171, %s172
    %p183 = scmp.eq.s32.totalorder %s19, 0
    %p184 = por %p182, %p183
    %p185 = scmp.ne.s32.totalorder %s171, %s172
    %p186 = scmp.eq.s32.totalorder %s20, 1
    %p187 = por %p185, %p186
    %p189 = scmp.ne.s32.totalorder %s172, %s188
    %p190 = scmp.eq.s32.totalorder %s20, 0
    %p191 = por %p189, %p190
    %s192 = ssub.s32 %s21, %s33
    %p193 = scmp.eq.s32.totalorder %s192, 0
    %s195 = sadd.s32 %s194, 1
    %s196 = scalar_select %p193, %s194, %s195
    %p199 = pneg %p193
    %p200 = scmp.eq.s32.totalorder %s14, 1
    %p201 = por %p199, %p200
    %p202 = scmp.ne.s32.totalorder %s194, %s197
    %p203 = scmp.eq.s32.totalorder %s14, 0
    %p204 = por %p202, %p203
    %p205 = scmp.ne.s32.totalorder %s194, %s197
    %p206 = scmp.eq.s32.totalorder %s19, 1
    %p207 = por %p205, %p206
    %p208 = scmp.ne.s32.totalorder %s197, %s198
    %p209 = scmp.eq.s32.totalorder %s19, 0
    %p210 = por %p208, %p209
    %p211 = scmp.ne.s32.totalorder %s197, %s198
    %p212 = scmp.eq.s32.totalorder %s20, 1
    %p213 = por %p211, %p212
    %p215 = scmp.ne.s32.totalorder %s198, %s214
    %p216 = scmp.eq.s32.totalorder %s20, 0
    %p217 = por %p215, %p216
    %s218 = ssub.s32 %s21, %s33
    %p219 = scmp.eq.s32.totalorder %s218, 0
    %s221 = sadd.s32 %s220, 1
    %s222 = scalar_select %p219, %s220, %s221
    %p225 = pneg %p219
    %p226 = scmp.eq.s32.totalorder %s14, 1
    %p227 = por %p225, %p226
    %p228 = scmp.ne.s32.totalorder %s220, %s223
    %p229 = scmp.eq.s32.totalorder %s14, 0
    %p230 = por %p228, %p229
    %p231 = scmp.ne.s32.totalorder %s220, %s223
    %p232 = scmp.eq.s32.totalorder %s19, 1
    %p233 = por %p231, %p232
    %p234 = scmp.ne.s32.totalorder %s223, %s224
    %p235 = scmp.eq.s32.totalorder %s19, 0
    %p236 = por %p234, %p235
    %p237 = scmp.ne.s32.totalorder %s223, %s224
    %p238 = scmp.eq.s32.totalorder %s20, 1
    %p239 = por %p237, %p238
    %p241 = scmp.ne.s32.totalorder %s224, %s240
    %p242 = scmp.eq.s32.totalorder %s20, 0
    %p243 = por %p241, %p242
    %p244 = scmp.le.s32.totalorder 1, %s14
    %p245 = scmp.lt.s32.totalorder %s14, 3
    %p246 = pnand %p244, %p245
    %p247 = pneg %p246
    // Predicated region
    $region9: #{model_pslf_forward.1} parent=5 // pred_check
      _
    $region10: #{model_pslf_forward.1} parent=5 // pred_check_branch
      %249 = sbr.rel (%p246) target = $region12
    $region11: #{model_pslf_forward.1} parent=5 // pred_region
      %s250 = ssub.s32 %s14, 1
      // Predicated region
      $region13: #{model_pslf_forward.1} parent=11 // pred_check
        %p251 = pneg %p52
      $region14: #{model_pslf_forward.1} parent=11 // pred_check_branch
        %253 = sbr.rel (%p251) target = $region16
      $region15: #{model_pslf_forward.1} parent=11 // pred_region
        %p254 = scmp.lt.s32.totalorder %s24, 0
        %s255 = scalar_select %p254, %s24, 0
        %s256 = smul.addr %s255, 4
        %s257 = scalar_lea.vmem %s0, %s256
      $region16: #{model_pslf_forward.1} parent=11 // pred_fallthru
        _
    $region12: #{model_pslf_forward.1} parent=5 // pred_fallthru
      _
    %p258 = scmp.lt.s32.totalorder %s14, 2
    // Predicated region
    $region17: #{model_pslf_forward.1} parent=5 // pred_check
      %p259 = pneg %p258
    $region18: #{model_pslf_forward.1} parent=5 // pred_check_branch
      %261 = sbr.rel (%p259) target = $region20
    $region19: #{model_pslf_forward.1} parent=5 // pred_region
      // Predicated region
      $region21: #{model_pslf_forward.1} parent=19 // pred_check
        %p262 = pneg %p74
      $region22: #{model_pslf_forward.1} parent=19 // pred_check_branch
        %264 = sbr.rel (%p262) target = $region24
      $region23: #{model_pslf_forward.1} parent=19 // pred_region
        %s265 = smul.u32 16, %s22
        %p266 = scmp.lt.s32.totalorder %s21, 1
        %s267 = scalar_select %p266, %s21, 1
        %p268 = scmp.lt.s32.totalorder %s265, 15
        %s269 = scalar_select %p268, %s265, 15
        %s270 = smul.addr %s267, 16
        %s271 = sadd.s32 %s269, %s270
        %s272 = smul.addr %s271, 4
        %s273 = scalar_lea.vmem %s1, %s272
        %s274 = smul.u32 16, %s22
      $region24: #{model_pslf_forward.1} parent=19 // pred_fallthru
        _
      // Predicated region
      $region25: #{model_pslf_forward.1} parent=19 // pred_check
        %p275 = pneg %p100
      $region26: #{model_pslf_forward.1} parent=19 // pred_check_branch
        %277 = sbr.rel (%p275) target = $region28
      $region27: #{model_pslf_forward.1} parent=19 // pred_region
        %p278 = scmp.lt.s32.totalorder %s21, 1
        %s279 = scalar_select %p278, %s21, 1
        %s280 = scalar_lea.vmem %s2, %s279
      $region28: #{model_pslf_forward.1} parent=19 // pred_fallthru
        _
      // Predicated region
      $region29: #{model_pslf_forward.1} parent=19 // pred_check
        %p281 = pneg %p126
      $region30: #{model_pslf_forward.1} parent=19 // pred_check_branch
        %283 = sbr.rel (%p281) target = $region32
      $region31: #{model_pslf_forward.1} parent=19 // pred_region
        %p284 = scmp.lt.s32.totalorder %s21, 1
        %s285 = scalar_select %p284, %s21, 1
        %s286 = smul.addr %s285, 16
        %s287 = smul.addr %s286, 4
        %s288 = scalar_lea.vmem %s3, %s287
      $region32: #{model_pslf_forward.1} parent=19 // pred_fallthru
        _
      // Predicated region
      $region33: #{model_pslf_forward.1} parent=19 // pred_check
        %p289 = pneg %p152
      $region34: #{model_pslf_forward.1} parent=19 // pred_check_branch
        %291 = sbr.rel (%p289) target = $region36
      $region35: #{model_pslf_forward.1} parent=19 // pred_region
        %p292 = scmp.lt.s32.totalorder %s21, 1
        %s293 = scalar_select %p292, %s21, 1
        %s294 = scalar_lea.vmem %s4, %s293
      $region36: #{model_pslf_forward.1} parent=19 // pred_fallthru
        _
      // Predicated region
      $region37: #{model_pslf_forward.1} parent=19 // pred_check
        %p295 = pneg %p178
      $region38: #{model_pslf_forward.1} parent=19 // pred_check_branch
        %297 = sbr.rel (%p295) target = $region40
      $region39: #{model_pslf_forward.1} parent=19 // pred_region
        %p298 = scmp.lt.s32.totalorder %s21, 1
        %s299 = scalar_select %p298, %s21, 1
        %s300 = smul.addr %s299, 8
        %s301 = scalar_lea.vmem %s5, %s300
      $region40: #{model_pslf_forward.1} parent=19 // pred_fallthru
        _
    $region20: #{model_pslf_forward.1} parent=5 // pred_fallthru
      _
    %p302 = scmp.le.s32.totalorder 1, %s14
    %p303 = scmp.lt.s32.totalorder %s14, 3
    %p304 = pnand %p302, %p303
    %p305 = pneg %p304
    // Predicated region
    $region41: #{model_pslf_forward.1} parent=5 // pred_check
      _
    $region42: #{model_pslf_forward.1} parent=5 // pred_check_branch
      %307 = sbr.rel (%p304) target = $region44
    $region43: #{model_pslf_forward.1} parent=5 // pred_region
      %s308 = ssub.s32 %s14, 1
      %p309 = scmp.lt.s32.totalorder %s24, 0
      %s310 = scalar_select %p309, %s24, 0
      %s311 = smul.addr %s310, 4
      %s312 = scalar_lea.vmem %s0, %s311
      %p313 = pneg %p52
      %p314 = pneg %p49
      %s315 = smul.u32 16, %s24
      %p316 = scmp.lt.s32.totalorder %s23, 1
      %s317 = scalar_select %p316, %s23, 1
      %p318 = scmp.lt.s32.totalorder %s315, 15
      %s319 = scalar_select %p318, %s315, 15
      %s320 = smul.addr %s317, 16
      %s321 = sadd.s32 %s319, %s320
      %s322 = smul.addr %s321, 4
      %s323 = scalar_lea.vmem %s1, %s322
      %p324 = pneg %p80
      %p325 = pneg %p77
      %p326 = scmp.lt.s32.totalorder %s23, 1
      %s327 = scalar_select %p326, %s23, 1
      %s328 = scalar_lea.vmem %s2, %s327
      %p329 = pneg %p106
      %p330 = pneg %p103
      %p331 = scmp.lt.s32.totalorder %s23, 1
      %s332 = scalar_select %p331, %s23, 1
      %s333 = smul.addr %s332, 16
      %s334 = smul.addr %s333, 4
      %s335 = scalar_lea.vmem %s3, %s334
      %p336 = pneg %p132
      %p337 = pneg %p129
      %p338 = scmp.lt.s32.totalorder %s23, 1
      %s339 = scalar_select %p338, %s23, 1
      %s340 = scalar_lea.vmem %s4, %s339
      %p341 = pneg %p158
      %p342 = pneg %p155
      %p343 = scmp.lt.s32.totalorder %s23, 1
      %s344 = scalar_select %p343, %s23, 1
      %s345 = smul.addr %s344, 8
      %s346 = scalar_lea.vmem %s5, %s345
      %p347 = pneg %p184
      %p348 = pneg %p181
      %p349 = pneg %p210
      %p350 = pneg %p207
      %p351 = scmp.lt.s32.totalorder %s23, 1
      %s352 = scalar_select %p351, %s23, 1
      %s353 = smul.addr %s352, 8
      %s354 = scalar_lea.vmem %s6, %s353
      %p355 = pneg %p236
      %p356 = pneg %p233
      %p357 = scmp.lt.s32.totalorder %s23, 1
      %s358 = scalar_select %p357, %s23, 1
      %s359 = smul.addr %s358, 8
      %s360 = scalar_lea.vmem %s7, %s359
      %p361 = scmp.lt.s32.totalorder %s24, 0
      %s362 = scalar_select %p361, %s24, 0
      %s363 = smul.addr %s362, 4
      %s364 = scalar_lea.vmem %s0, %s363
      %s365 = smul.u32 16, %s24
      %p366 = scmp.lt.s32.totalorder %s23, 1
      %s367 = scalar_select %p366, %s23, 1
      %p368 = scmp.lt.s32.totalorder %s365, 15
      %s369 = scalar_select %p368, %s365, 15
      %s370 = smul.addr %s367, 16
      %s371 = sadd.s32 %s369, %s370
      %s372 = smul.addr %s371, 4
      %s373 = scalar_lea.vmem %s1, %s372
      %s374 = smul.u32 16, %s24
      %p375 = scmp.lt.s32.totalorder %s23, 1
      %s376 = scalar_select %p375, %s23, 1
      %s377 = scalar_lea.vmem %s2, %s376
      %p378 = scmp.lt.s32.totalorder %s23, 1
      %s379 = scalar_select %p378, %s23, 1
      %s380 = smul.addr %s379, 16
      %s381 = smul.addr %s380, 4
      %s382 = scalar_lea.vmem %s3, %s381
      %p383 = scmp.lt.s32.totalorder %s23, 1
      %s384 = scalar_select %p383, %s23, 1
      %s385 = scalar_lea.vmem %s4, %s384
      %p386 = scmp.lt.s32.totalorder %s23, 1
      %s387 = scalar_select %p386, %s23, 1
      %s388 = smul.addr %s387, 8
      %s389 = scalar_lea.vmem %s5, %s388
      %p390 = scmp.lt.s32.totalorder %s23, 1
      %s391 = scalar_select %p390, %s23, 1
      %s392 = smul.addr %s391, 8
      %s393 = scalar_lea.vmem %s6, %s392
      %p394 = scmp.lt.s32.totalorder %s23, 1
      %s395 = scalar_select %p394, %s23, 1
      %s396 = smul.addr %s395, 8
      %s397 = scalar_lea.vmem %s7, %s396
      %p399 = scmp.eq.s32.totalorder %s24, 0
      // Predicated region
      $region45: #{model_pslf_forward.1} parent=43 // pred_check
        %p400 = pneg %p399
      $region46: #{model_pslf_forward.1} parent=43 // pred_check_branch
        %402 = sbr.rel (%p400) target = $region48
      $region47: #{model_pslf_forward.1} parent=43 // pred_region
        %403 = vst [vmem:[#allocation2] sm:$0xff] 0.0
      $region48: #{model_pslf_forward.1} parent=43 // pred_fallthru
        _
      %v404 = vld [vmem:[#allocation2] sm:$0xff]
      %v405 = vld [vmem:[%s364] sm:$0xf]
      %v406 = vld [vmem:[%s373] sm:$0xf]
      %v407 = vld [vmem:[%s373 + $0x4] sm:$0xf]
      %v408 = vld [vmem:[%s373 + $0x8] sm:$0xf]
      %v409 = vld [vmem:[%s373 + $0xc] sm:$0xf]
      %v410 = vld [vmem:[%s373 + $0x10] sm:$0xf]
      %v411 = vld [vmem:[%s373 + $0x14] sm:$0xf]
      %v412 = vld [vmem:[%s373 + $0x18] sm:$0xf]
      %v413 = vld [vmem:[%s373 + $0x1c] sm:$0xf]
      %v414 = vld [vmem:[%s373 + $0x20] sm:$0xf]
      %v415 = vld [vmem:[%s373 + $0x24] sm:$0xf]
      %v416 = vld [vmem:[%s373 + $0x28] sm:$0xf]
      %v417 = vld [vmem:[%s373 + $0x2c] sm:$0xf]
      %v418 = vld [vmem:[%s373 + $0x30] sm:$0xf]
      %v419 = vld [vmem:[%s373 + $0x34] sm:$0xf]
      %v420 = vld [vmem:[%s373 + $0x38] sm:$0xf]
      %v421 = vld [vmem:[%s373 + $0x3c] sm:$0xf]
      %v438 = vunpack.c.l.b16 %v406
      %v439 = vunpack.c.l.b16 %v407
      %v440 = vunpack.c.l.b16 %v408
      %v441 = vunpack.c.l.b16 %v409
      %v442 = vunpack.c.l.b16 %v410
      %v443 = vunpack.c.l.b16 %v411
      %v444 = vunpack.c.l.b16 %v412
      %v445 = vunpack.c.l.b16 %v413
      %v446 = vunpack.c.l.b16 %v414
      %v447 = vunpack.c.l.b16 %v415
      %v448 = vunpack.c.l.b16 %v416
      %v449 = vunpack.c.l.b16 %v417
      %v450 = vunpack.c.l.b16 %v418
      %v451 = vunpack.c.l.b16 %v419
      %v452 = vunpack.c.l.b16 %v420
      %v453 = vunpack.c.l.b16 %v421
      %v454 = vpack.c.b16 %v439, %v438
      %v455 = vpack.c.b16 %v441, %v440
      %v456 = vpack.c.b16 %v443, %v442
      %v457 = vpack.c.b16 %v445, %v444
      %v458 = vpack.c.b16 %v447, %v446
      %v459 = vpack.c.b16 %v449, %v448
      %v460 = vpack.c.b16 %v451, %v450
      %v461 = vpack.c.b16 %v453, %v452
      %470 = vmatprep.subr.bf16.mxu0 0
      %471 = vmatpush1.bf16.msra.mxu0 %v454
      %472 = vmatprep.subr.bf16.mxu0 0
      %473 = vmatpush1.bf16.msra.mxu0 %v455
      %474 = vmatprep.subr.bf16.mxu0 0
      %475 = vmatpush1.bf16.msra.mxu0 %v456
      %476 = vmatprep.subr.bf16.mxu0 0
      %477 = vmatpush1.bf16.msra.mxu0 %v457
      %478 = vmatprep.subr.bf16.mxu0 0
      %479 = vmatpush1.bf16.msra.mxu0 %v458
      %480 = vmatprep.subr.bf16.mxu0 0
      %481 = vmatpush1.bf16.msra.mxu0 %v459
      %482 = vmatprep.subr.bf16.mxu0 0
      %483 = vmatpush1.bf16.msra.mxu0 %v460
      %484 = vmatprep.subr.bf16.mxu0 0
      %485 = vmatpush1.bf16.msra.mxu0 %v461
      %486 = vmatprep.subr.bf16.mxu0 0
      %487 = vmatpush1.bf16.msra.mxu0 0
      %488 = vmatprep.subr.bf16.mxu0 0
      %489 = vmatpush1.bf16.msra.mxu0 0
      %490 = vmatprep.subr.bf16.mxu0 0
      %491 = vmatpush1.bf16.msra.mxu0 0
      %492 = vmatprep.subr.bf16.mxu0 0
      %493 = vmatpush1.bf16.msra.mxu0 0
      %494 = vmatprep.subr.bf16.mxu0 0
      %495 = vmatpush1.bf16.msra.mxu0 0
      %496 = vmatprep.subr.bf16.mxu0 0
      %497 = vmatpush1.bf16.msra.mxu0 0
      %498 = vmatprep.subr.bf16.mxu0 0
      %499 = vmatpush1.bf16.msra.mxu0 0
      %500 = vmatprep.subr.bf16.mxu0 0
      %501 = vmatpush1.bf16.msra.mxu0 0
      %502 = vmatprep.mubr.bf16.mxu0 0
      %503 = vmatmul.mubr.bf16.gmra.mrb[0].mxu0 %v405
      %v504 = vpop.f32.mrb[0].mxu0
      %v505 = vadd.f32 0.0, %v504
      %v506 = vpop.f32.mrb[0].mxu0
      %v507 = vpop.f32.mrb[0].mxu0
      %v508 = vpop.f32.mrb[0].mxu0
      %509 = vdwg.mxu0
      %v510 = vadd.f32 %v404, %v505
      %511 = vst [vmem:[#allocation2] sm:$0xff] %v510
      // Predicated region
      $region49: #{model_pslf_forward.1} parent=43 // pred_check
        %p512 = pneg %p399
      $region50: #{model_pslf_forward.1} parent=43 // pred_check_branch
        %514 = sbr.rel (%p512) target = $region52
      $region51: #{model_pslf_forward.1} parent=43 // pred_region
        %v515 = vld [vmem:[#allocation2] sm:$0xff]
        %v516 = vld [vmem:[%s377] sm:$0x1]
        %v518 = vlaneseq
        %v519 = vshrl.u32 %v518, 7
        %v520 = vsub.s32 0, %v519
        %v521 = vrot.slane %v516, %v520
        %v523 = vadd.f32 %v515, %v521
        %v524 = vmul.f32 %v523, %v523
        %v525 = vmul.f32 %v523, %v524
        %v526 = vmul.f32 %v525, 0.044715
        %v527 = vadd.f32 %v523, %v526
        %v528 = vmul.f32 %v527, 0.7978846
        %v529 = vtanh.pop %v528
        %v530 = vadd.f32 %v529, 1.0
        %v531 = vmul.f32 %v530, 0.5
        %v532 = vmul.f32 %v523, %v531
        %v533 = vpack.c.bf16 %v532, %v532
        %v534 = vld [vmem:[%s382] sm:$0xf]
        %v535 = vld [vmem:[%s382 + $0x4] sm:$0xf]
        %v536 = vld [vmem:[%s382 + $0x8] sm:$0xf]
        %v537 = vld [vmem:[%s382 + $0xc] sm:$0xf]
        %v538 = vld [vmem:[%s382 + $0x10] sm:$0xf]
        %v539 = vld [vmem:[%s382 + $0x14] sm:$0xf]
        %v540 = vld [vmem:[%s382 + $0x18] sm:$0xf]
        %v541 = vld [vmem:[%s382 + $0x1c] sm:$0xf]
        %v542 = vld [vmem:[%s382 + $0x20] sm:$0xf]
        %v543 = vld [vmem:[%s382 + $0x24] sm:$0xf]
        %v544 = vld [vmem:[%s382 + $0x28] sm:$0xf]
        %v545 = vld [vmem:[%s382 + $0x2c] sm:$0xf]
        %v546 = vld [vmem:[%s382 + $0x30] sm:$0xf]
        %v547 = vld [vmem:[%s382 + $0x34] sm:$0xf]
        %v548 = vld [vmem:[%s382 + $0x38] sm:$0xf]
        %v549 = vld [vmem:[%s382 + $0x3c] sm:$0xf]
        %v550 = vld [vmem:[%s385] sm:$0x1]
        %v552 = vlaneseq
        %v553 = vshrl.u32 %v552, 7
        %v554 = vsub.s32 0, %v553
        %v555 = vrot.slane %v550, %v554
        %v573 = vunpack.c.l.b16 %v534
        %v574 = vunpack.c.l.b16 %v535
        %v575 = vunpack.c.l.b16 %v536
        %v576 = vunpack.c.l.b16 %v537
        %v577 = vunpack.c.l.b16 %v538
        %v578 = vunpack.c.l.b16 %v539
        %v579 = vunpack.c.l.b16 %v540
        %v580 = vunpack.c.l.b16 %v541
        %v581 = vunpack.c.l.b16 %v542
        %v582 = vunpack.c.l.b16 %v543
        %v583 = vunpack.c.l.b16 %v544
        %v584 = vunpack.c.l.b16 %v545
        %v585 = vunpack.c.l.b16 %v546
        %v586 = vunpack.c.l.b16 %v547
        %v587 = vunpack.c.l.b16 %v548
        %v588 = vunpack.c.l.b16 %v549
        %v589 = vpack.c.b16 %v574, %v573
        %v590 = vpack.c.b16 %v576, %v575
        %v591 = vpack.c.b16 %v578, %v577
        %v592 = vpack.c.b16 %v580, %v579
        %v593 = vpack.c.b16 %v582, %v581
        %v594 = vpack.c.b16 %v584, %v583
        %v595 = vpack.c.b16 %v586, %v585
        %v596 = vpack.c.b16 %v588, %v587
        %605 = vmatprep.subr.bf16.mxu0 0
        %606 = vmatpush1.bf16.msra.mxu0 %v589
        %607 = vmatprep.subr.bf16.mxu0 0
        %608 = vmatpush1.bf16.msra.mxu0 %v590
        %609 = vmatprep.subr.bf16.mxu0 0
        %610 = vmatpush1.bf16.msra.mxu0 %v591
        %611 = vmatprep.subr.bf16.mxu0 0
        %612 = vmatpush1.bf16.msra.mxu0 %v592
        %613 = vmatprep.subr.bf16.mxu0 0
        %614 = vmatpush1.bf16.msra.mxu0 %v593
        %615 = vmatprep.subr.bf16.mxu0 0
        %616 = vmatpush1.bf16.msra.mxu0 %v594
        %617 = vmatprep.subr.bf16.mxu0 0
        %618 = vmatpush1.bf16.msra.mxu0 %v595
        %619 = vmatprep.subr.bf16.mxu0 0
        %620 = vmatpush1.bf16.msra.mxu0 %v596
        %621 = vmatprep.subr.bf16.mxu0 0
        %622 = vmatpush1.bf16.msra.mxu0 0
        %623 = vmatprep.subr.bf16.mxu0 0
        %624 = vmatpush1.bf16.msra.mxu0 0
        %625 = vmatprep.subr.bf16.mxu0 0
        %626 = vmatpush1.bf16.msra.mxu0 0
        %627 = vmatprep.subr.bf16.mxu0 0
        %628 = vmatpush1.bf16.msra.mxu0 0
        %629 = vmatprep.subr.bf16.mxu0 0
        %630 = vmatpush1.bf16.msra.mxu0 0
        %631 = vmatprep.subr.bf16.mxu0 0
        %632 = vmatpush1.bf16.msra.mxu0 0
        %633 = vmatprep.subr.bf16.mxu0 0
        %634 = vmatpush1.bf16.msra.mxu0 0
        %635 = vmatprep.subr.bf16.mxu0 0
        %636 = vmatpush1.bf16.msra.mxu0 0
        %637 = vmatprep.mubr.bf16.mxu0 0
        %638 = vmatmul.mubr.bf16.gmra.mrb[0].mxu0 %v533
        %v639 = vpop.f32.mrb[0].mxu0
        %v640 = vadd.f32 %v555, %v639
        %v641 = vpop.f32.mrb[0].mxu0
        %v642 = vpop.f32.mrb[0].mxu0
        %v643 = vpop.f32.mrb[0].mxu0
        %644 = vdwg.mxu0
        %v645 = vlaneseq
        %v646 = vand.u32 %v645, 127
        %vm647 = vcmp.lt.s32.totalorder %v646, 2
        %v648 = vsel %vm647, %v640, -1e+30
        %649 = vmax.xlane.f32.xlu0 %v648
        %v650 = vpop.xlane.xlu0 %649
        %v651 = vsub.f32 %v648, %v650
        %v652 = vmul.f32 %v651, 1.442695
        %v653 = vpow.pop %v652
        %654 = vadd.xlane.f32.xlu0 %v653
        %v655 = vpop.xlane.xlu0 %654
        %v656 = vlog2.pop %v655
        %v657 = vmul.f32 %v656, 0.6931472
        %v658 = vld [vmem:[%s389] sm:$0xff]
        %659 = vset.pattern.permute.xlu0 0
        %660 = vperm.xlu0 %659, %v658
        %v661 = vpop.permute.xlu0 %660
        %vm662 = vcmp.eq.s32.totalorder %v646, %v661
        %v663 = vsel %vm662, %v651, 0.0
        %664 = vadd.xlane.f32.xlu0 %v663
        %v665 = vpop.xlane.xlu0 %664
        %v666 = vsub.f32 %v657, %v665
        %v667 = vrot.slane %v666, 4
        %v668 = vadd.f32 %v666, %v667
        %v669 = vrot.slane %v668, 2
        %v670 = vadd.f32 %v668, %v669
        %v671 = vrot.slane %v670, 1
        %v672 = vadd.f32 %v670, %v671
        %v673 = vrcp.pop 8.0
        %v674 = vmul.f32 %v672, %v673
        %675 = vst [vmem:[%s393] sm:$0xff] %v674
        %676 = vst [vmem:[%s397] sm:$0xff] %v640
      $region52: #{model_pslf_forward.1} parent=43 // pred_fallthru
        _
      %p677 = scmp.lt.s32.totalorder %s23, 1
      %s678 = scalar_select %p677, %s23, 1
      %s679 = smul.addr %s678, 8
      %s680 = scalar_lea.vmem %s6, %s679
      %p681 = scmp.lt.s32.totalorder %s23, 1
      %s682 = scalar_select %p681, %s23, 1
      %s683 = smul.addr %s682, 8
      %s684 = scalar_lea.vmem %s7, %s683
      // Predicated region
      $region53: #{model_pslf_forward.1} parent=43 // pred_check
        %p685 = pneg %p207
      $region54: #{model_pslf_forward.1} parent=43 // pred_check_branch
        %687 = sbr.rel (%p685) target = $region56
      $region55: #{model_pslf_forward.1} parent=43 // pred_region
        _
      $region56: #{model_pslf_forward.1} parent=43 // pred_fallthru
        _
      // Predicated region
      $region57: #{model_pslf_forward.1} parent=43 // pred_check
        %p688 = pneg %p233
      $region58: #{model_pslf_forward.1} parent=43 // pred_check_branch
        %690 = sbr.rel (%p688) target = $region60
      $region59: #{model_pslf_forward.1} parent=43 // pred_region
        _
      $region60: #{model_pslf_forward.1} parent=43 // pred_fallthru
        _
    $region44: #{model_pslf_forward.1} parent=5 // pred_fallthru
      _
    %p691 = scmp.le.s32.totalorder 2, %s14
    // Predicated region
    $region61: #{model_pslf_forward.1} parent=5 // pred_check
      %p692 = pneg %p691
    $region62: #{model_pslf_forward.1} parent=5 // pred_check_branch
      %694 = sbr.rel (%p692) target = $region64
    $region63: #{model_pslf_forward.1} parent=5 // pred_region
      %s695 = ssub.s32 %s14, 2
      // Predicated region
      $region65: #{model_pslf_forward.1} parent=63 // pred_check
        %p696 = pneg %p213
      $region66: #{model_pslf_forward.1} parent=63 // pred_check_branch
        %698 = sbr.rel (%p696) target = $region68
      $region67: #{model_pslf_forward.1} parent=63 // pred_region
        %p699 = scmp.lt.s32.totalorder %s25, 1
        %s700 = scalar_select %p699, %s25, 1
        %s701 = smul.addr %s700, 8
        %s702 = scalar_lea.vmem %s6, %s701
      $region68: #{model_pslf_forward.1} parent=63 // pred_fallthru
        _
      // Predicated region
      $region69: #{model_pslf_forward.1} parent=63 // pred_check
        %p703 = pneg %p239
      $region70: #{model_pslf_forward.1} parent=63 // pred_check_branch
        %705 = sbr.rel (%p703) target = $region72
      $region71: #{model_pslf_forward.1} parent=63 // pred_region
        %p706 = scmp.lt.s32.totalorder %s25, 1
        %s707 = scalar_select %p706, %s25, 1
        %s708 = smul.addr %s707, 8
        %s709 = scalar_lea.vmem %s7, %s708
      $region72: #{model_pslf_forward.1} parent=63 // pred_fallthru
        _
    $region64: #{model_pslf_forward.1} parent=5 // pred_fallthru
      _
  $region6: #{model_pslf_forward.1} parent=0 // loop_footer
    %s18 = sadd.s32 1, %s14
  $region7: #{model_pslf_forward.1} parent=0 // loop_footer_branch
    %13 = sbr.rel target = $region3
  $region8: #{model_pslf_forward.1} parent=0 // loop_exit
    _

</llo_original>
